<compile_context>
chip_gen: v7x
topology: tpu7x:2x2x1
jax: 0.10.0
libtpu: 0.0.40
codegen_flags: <defaults>
</compile_context>

<pallas_src>
import functools

import jax
import jax.numpy as jnp
from jax.experimental import pallas as pl
from jax.experimental.pallas import tpu as pltpu

LANE = 128


def _dice_kernel(logits_ref, targets_ref, loss_ref, acc_pt, acc_p, acc_t, *,
                 smooth, valid_size, needs_mask):
    n = pl.program_id(0)   # batch block
    s = pl.program_id(1)   # spatial block

    @pl.when((n == 0) & (s == 0))
    def _init():
        acc_pt[...] = jnp.zeros_like(acc_pt)
        acc_p[...] = jnp.zeros_like(acc_p)
        acc_t[...] = jnp.zeros_like(acc_t)

    C = logits_ref.shape[0]

    # Class-1 probability, sigmoid form: 1 / (1 + sum_{c != 1} exp(x_c - x_1)).
    # exp overflow -> +inf -> probs1 -> 0 (the correct limit), so no max-shift.
    x1 = logits_ref[1].astype(jnp.float32)            # (tR, LANE)
    denom = jnp.ones_like(x1)                          # c == 1 term: exp(0) = 1
    for c in range(C):                                 # static, unrolled
        if c == 1:
            continue
        denom = denom + jnp.exp(logits_ref[c].astype(jnp.float32) - x1)
    probs1 = pl.reciprocal(denom, approx=True)         # EUP slot, ~2^-12 rel err

    t = (targets_ref[...] == 1).astype(jnp.float32)    # (tR, LANE)

    if needs_mask:
        # Zero out padded flat positions >= H*W (targets were zero-padded, so
        # only probs1 needs masking).
        tR = probs1.shape[0]
        row = jax.lax.broadcasted_iota(jnp.int32, probs1.shape, 0)
        lane = jax.lax.broadcasted_iota(jnp.int32, probs1.shape, 1)
        flat = (s * tR + row) * LANE + lane
        probs1 = jnp.where(flat < valid_size, probs1, 0.0)

    # Pure VPU elementwise accumulation — no per-step reduction.
    acc_pt[...] += probs1 * t
    acc_p[...] += probs1
    acc_t[...] += t

    @pl.when((n == pl.num_programs(0) - 1) & (s == pl.num_programs(1) - 1))
    def _finalize():
        intersection = jnp.sum(acc_pt[...])
        union = jnp.sum(acc_p[...]) + jnp.sum(acc_t[...])
        dice = (2.0 * intersection + smooth) / (union + smooth)
        loss_ref[0] = 1.0 - dice


def dice_loss(logits, targets, smooth=1.0):
    N, C, H, W = logits.shape
    assert targets.shape == (N, H, W)
    assert C >= 2

    S = H * W
    R = -(-S // LANE)                       # rows of 128 lanes (cdiv)

    # Spatial tile rows: lane-dense, multiple of 8, bounded so the
    # double-buffered logits block stays small even for large C (portable down
    # to v7x's 64 MiB physical VMEM).
    bytes_per_row = C * LANE * 4            # f32 logits bytes per spatial row
    max_tr = max(8, min(1024, (8 * 1024 * 1024) // (2 * bytes_per_row)))
    max_tr = (max_tr // 8) * 8
    if R <= max_tr:
        tR, R_pad = R, R                    # block == full dims (always legal)
    else:
        tR = max_tr
        R_pad = -(-R // tR) * tR

    pad = R_pad * LANE - S
    logits_r = logits.reshape(N, C, S)
    targets_r = targets.reshape(N, S)
    if pad:
        logits_r = jnp.pad(logits_r, ((0, 0), (0, 0), (0, pad)))
        targets_r = jnp.pad(targets_r, ((0, 0), (0, pad)))
    logits_r = logits_r.reshape(N, C, R_pad, LANE)
    targets_r = targets_r.reshape(N, R_pad, LANE)

    kernel = functools.partial(_dice_kernel, smooth=float(smooth),
                               valid_size=S, needs_mask=bool(pad))

    loss = pl.pallas_call(
        kernel,
        out_shape=jax.ShapeDtypeStruct((1,), jnp.float32),
        grid_spec=pltpu.PrefetchScalarGridSpec(
            num_scalar_prefetch=0,
            grid=(N, R_pad // tR),
            in_specs=[
                # (None, C, tR, LANE): squeeze batch, kernel sees (C, tR, 128)
                pl.BlockSpec((None, C, tR, LANE), lambda n, s: (n, 0, s, 0)),
                pl.BlockSpec((None, tR, LANE), lambda n, s: (n, s, 0)),
            ],
            # Scalar loss lives in SMEM for the whole call; written last step.
            out_specs=pl.BlockSpec(memory_space=pltpu.SMEM),
            scratch_shapes=[
                pltpu.VMEM((tR, LANE), jnp.float32),   # sum(probs1 * t)
                pltpu.VMEM((tR, LANE), jnp.float32),   # sum(probs1)
                pltpu.VMEM((tR, LANE), jnp.float32),   # sum(t)
            ],
        ),
        compiler_params=pltpu.CompilerParams(
            # Global accumulation carried across both axes -> sequential.
            dimension_semantics=("arbitrary", "arbitrary"),
            vmem_limit_bytes=32 * 1024 * 1024,
        ),
    )(logits_r, targets_r)
    return loss[0]


def dice_loss_reference(logits, targets, smooth=1.0):
    probs = jax.nn.softmax(logits.astype(jnp.float32), axis=1)[:, 1, :, :]
    t = (targets == 1).astype(jnp.float32)
    intersection = jnp.sum(probs * t)
    union = jnp.sum(probs) + jnp.sum(t)
    dice = (2.0 * intersection + smooth) / (union + smooth)
    return 1.0 - dice


if __name__ == "__main__":
    key = jax.random.PRNGKey(0)
    k1, k2 = jax.random.split(key)

    N, C, H, W = 2, 4, 16, 16
    logits = jax.random.normal(k1, (N, C, H, W), dtype=jnp.float32)
    targets = jax.random.randint(k2, (N, H, W), minval=0, maxval=C, dtype=jnp.int32)

    out = jax.block_until_ready(dice_loss(logits, targets, smooth=1.0))
    ref = jax.block_until_ready(dice_loss_reference(logits, targets, smooth=1.0))

    # approx=True reciprocal has ~2^-12 relative error; loosen tolerance
    # accordingly (still far tighter than is meaningful for a loss scalar).
    assert jnp.allclose(out, ref, atol=1e-3, rtol=1e-3), (out, ref)
    print("KERNEL_OK")
</pallas_src>

<mosaic_0001>
module attributes {stable_mosaic.version = 11 : i64} {
  func.func @_dice_kernel(%arg0: i32, %arg1: i32, %arg2: memref<1x4x2x128xf32, #tpu.memory_space<vmem>>, %arg3: memref<1x2x128xi32, #tpu.memory_space<vmem>>, %arg4: memref<1xf32, #tpu.memory_space<smem>>, %arg5: memref<2x128xf32, #tpu.memory_space<vmem>>, %arg6: memref<2x128xf32, #tpu.memory_space<vmem>>, %arg7: memref<2x128xf32, #tpu.memory_space<vmem>>) attributes {dimension_semantics = [#tpu.dimension_semantics<arbitrary>, #tpu.dimension_semantics<arbitrary>], iteration_bounds = array<i64: 2, 1>, scalar_prefetch = 0 : i64, scratch_operands = 3 : i64, tpu.core_type = #tpu.core_type<tc>, window_params = [{transform_indices = @transform_0, window_bounds = array<i64: 1, 4, 2, 128>}, {transform_indices = @transform_1, window_bounds = array<i64: 1, 2, 128>}, {transform_indices = @transform_2, window_bounds = array<i64: 1>}]} {
    %c0_i32 = arith.constant 0 : i32
    %0 = arith.cmpi eq, %arg0, %c0_i32 : i32
    %c0_i32_0 = arith.constant 0 : i32
    %1 = arith.cmpi eq, %arg1, %c0_i32_0 : i32
    %2 = arith.andi %0, %1 : i1
    %3 = arith.extui %2 : i1 to i32
    %c0_i32_1 = arith.constant 0 : i32
    %4 = arith.cmpi ne, %3, %c0_i32_1 : i32
    scf.if %4 {
      %cst_32 = arith.constant 0.000000e+00 : f32
      %45 = vector.broadcast %cst_32 : f32 to vector<2x128xf32>
      %c0_33 = arith.constant 0 : index
      %c0_34 = arith.constant 0 : index
      %46 = vector.load %arg5[%c0_33, %c0_34] : memref<2x128xf32, #tpu.memory_space<vmem>>, vector<2x128xf32>
      tpu.vector_store %arg5[%c0_33, %c0_34], %45 {strides = array<i32>} : memref<2x128xf32, #tpu.memory_space<vmem>>, vector<2x128xf32>,
      %cst_35 = arith.constant 0.000000e+00 : f32
      %47 = vector.broadcast %cst_35 : f32 to vector<2x128xf32>
      %c0_36 = arith.constant 0 : index
      %c0_37 = arith.constant 0 : index
      %48 = vector.load %arg6[%c0_36, %c0_37] : memref<2x128xf32, #tpu.memory_space<vmem>>, vector<2x128xf32>
      tpu.vector_store %arg6[%c0_36, %c0_37], %47 {strides = array<i32>} : memref<2x128xf32, #tpu.memory_space<vmem>>, vector<2x128xf32>,
      %cst_38 = arith.constant 0.000000e+00 : f32
      %49 = vector.broadcast %cst_38 : f32 to vector<2x128xf32>
      %c0_39 = arith.constant 0 : index
      %c0_40 = arith.constant 0 : index
      %50 = vector.load %arg7[%c0_39, %c0_40] : memref<2x128xf32, #tpu.memory_space<vmem>>, vector<2x128xf32>
      tpu.vector_store %arg7[%c0_39, %c0_40], %49 {strides = array<i32>} : memref<2x128xf32, #tpu.memory_space<vmem>>, vector<2x128xf32>,
    } else {
    }
    %c0 = arith.constant 0 : index
    %c1 = arith.constant 1 : index
    %c0_2 = arith.constant 0 : index
    %c0_3 = arith.constant 0 : index
    %5 = vector.load %arg2[%c0, %c1, %c0_2, %c0_3] : memref<1x4x2x128xf32, #tpu.memory_space<vmem>>, vector<1x1x2x128xf32>
    %6 = vector.shape_cast %5 : vector<1x1x2x128xf32> to vector<2x128xf32>
    %cst = arith.constant 1.000000e+00 : f32
    %7 = vector.broadcast %cst : f32 to vector<2x128xf32>
    %c0_4 = arith.constant 0 : index
    %c0_5 = arith.constant 0 : index
    %c0_6 = arith.constant 0 : index
    %c0_7 = arith.constant 0 : index
    %8 = vector.load %arg2[%c0_4, %c0_5, %c0_6, %c0_7] : memref<1x4x2x128xf32, #tpu.memory_space<vmem>>, vector<1x1x2x128xf32>
    %9 = vector.shape_cast %8 : vector<1x1x2x128xf32> to vector<2x128xf32>
    %10 = arith.subf %9, %6 : vector<2x128xf32>
    %11 = math.exp %10 : vector<2x128xf32>
    %12 = arith.addf %7, %11 : vector<2x128xf32>
    %c0_8 = arith.constant 0 : index
    %c2 = arith.constant 2 : index
    %c0_9 = arith.constant 0 : index
    %c0_10 = arith.constant 0 : index
    %13 = vector.load %arg2[%c0_8, %c2, %c0_9, %c0_10] : memref<1x4x2x128xf32, #tpu.memory_space<vmem>>, vector<1x1x2x128xf32>
    %14 = vector.shape_cast %13 : vector<1x1x2x128xf32> to vector<2x128xf32>
    %15 = arith.subf %14, %6 : vector<2x128xf32>
    %16 = math.exp %15 : vector<2x128xf32>
    %17 = arith.addf %12, %16 : vector<2x128xf32>
    %c0_11 = arith.constant 0 : index
    %c3 = arith.constant 3 : index
    %c0_12 = arith.constant 0 : index
    %c0_13 = arith.constant 0 : index
    %18 = vector.load %arg2[%c0_11, %c3, %c0_12, %c0_13] : memref<1x4x2x128xf32, #tpu.memory_space<vmem>>, vector<1x1x2x128xf32>
    %19 = vector.shape_cast %18 : vector<1x1x2x128xf32> to vector<2x128xf32>
    %20 = arith.subf %19, %6 : vector<2x128xf32>
    %21 = math.exp %20 : vector<2x128xf32>
    %22 = arith.addf %17, %21 : vector<2x128xf32>
    %23 = tpu.reciprocal %22 {approx = true} : vector<2x128xf32> -> vector<2x128xf32>
    %c0_14 = arith.constant 0 : index
    %c0_15 = arith.constant 0 : index
    %c0_16 = arith.constant 0 : index
    %24 = vector.load %arg3[%c0_14, %c0_15, %c0_16] : memref<1x2x128xi32, #tpu.memory_space<vmem>>, vector<1x2x128xi32>
    %25 = vector.shape_cast %24 : vector<1x2x128xi32> to vector<2x128xi32>
    %c1_i32 = arith.constant 1 : i32
    %26 = vector.broadcast %c1_i32 : i32 to vector<2x128xi32>
    %27 = arith.cmpi eq, %25, %26 : vector<2x128xi32>
    %28 = arith.extui %27 : vector<2x128xi1> to vector<2x128xi32>
    %29 = arith.sitofp %28 : vector<2x128xi32> to vector<2x128xf32>
    %c0_17 = arith.constant 0 : index
    %c0_18 = arith.constant 0 : index
    %30 = vector.load %arg5[%c0_17, %c0_18] : memref<2x128xf32, #tpu.memory_space<vmem>>, vector<2x128xf32>
    %31 = arith.mulf %23, %29 : vector<2x128xf32>
    %32 = arith.addf %30, %31 : vector<2x128xf32>
    %c0_19 = arith.constant 0 : index
    %c0_20 = arith.constant 0 : index
    %33 = vector.load %arg5[%c0_19, %c0_20] : memref<2x128xf32, #tpu.memory_space<vmem>>, vector<2x128xf32>
    tpu.vector_store %arg5[%c0_19, %c0_20], %32 {strides = array<i32>} : memref<2x128xf32, #tpu.memory_space<vmem>>, vector<2x128xf32>,
    %c0_21 = arith.constant 0 : index
    %c0_22 = arith.constant 0 : index
    %34 = vector.load %arg6[%c0_21, %c0_22] : memref<2x128xf32, #tpu.memory_space<vmem>>, vector<2x128xf32>
    %35 = arith.addf %34, %23 : vector<2x128xf32>
    %c0_23 = arith.constant 0 : index
    %c0_24 = arith.constant 0 : index
    %36 = vector.load %arg6[%c0_23, %c0_24] : memref<2x128xf32, #tpu.memory_space<vmem>>, vector<2x128xf32>
    tpu.vector_store %arg6[%c0_23, %c0_24], %35 {strides = array<i32>} : memref<2x128xf32, #tpu.memory_space<vmem>>, vector<2x128xf32>,
    %c0_25 = arith.constant 0 : index
    %c0_26 = arith.constant 0 : index
    %37 = vector.load %arg7[%c0_25, %c0_26] : memref<2x128xf32, #tpu.memory_space<vmem>>, vector<2x128xf32>
    %38 = arith.addf %37, %29 : vector<2x128xf32>
    %c0_27 = arith.constant 0 : index
    %c0_28 = arith.constant 0 : index
    %39 = vector.load %arg7[%c0_27, %c0_28] : memref<2x128xf32, #tpu.memory_space<vmem>>, vector<2x128xf32>
    tpu.vector_store %arg7[%c0_27, %c0_28], %38 {strides = array<i32>} : memref<2x128xf32, #tpu.memory_space<vmem>>, vector<2x128xf32>,
    %c1_i32_29 = arith.constant 1 : i32
    %40 = arith.cmpi eq, %arg0, %c1_i32_29 : i32
    %c0_i32_30 = arith.constant 0 : i32
    %41 = arith.cmpi eq, %arg1, %c0_i32_30 : i32
    %42 = arith.andi %40, %41 : i1
    %43 = arith.extui %42 : i1 to i32
    %c0_i32_31 = arith.constant 0 : i32
    %44 = arith.cmpi ne, %43, %c0_i32_31 : i32
    scf.if %44 {
      %c0_32 = arith.constant 0 : index
      %c0_33 = arith.constant 0 : index
      %45 = vector.load %arg5[%c0_32, %c0_33] : memref<2x128xf32, #tpu.memory_space<vmem>>, vector<2x128xf32>
      %46 = vector.shape_cast %45 : vector<2x128xf32> to vector<1x2x128xf32>
      %cst_34 = arith.constant dense<0.000000e+00> : vector<1xf32>
      %47 = vector.multi_reduction <add>, %46, %cst_34 [1, 2] : vector<1x2x128xf32> to vector<1xf32>
      %48 = vector.shape_cast %47 : vector<1xf32> to vector<1x1x1xf32>
      %49 = vector.extract %48[0, 0, 0] : f32 from vector<1x1x1xf32>
      %c0_35 = arith.constant 0 : index
      %c0_36 = arith.constant 0 : index
      %50 = vector.load %arg6[%c0_35, %c0_36] : memref<2x128xf32, #tpu.memory_space<vmem>>, vector<2x128xf32>
      %51 = vector.shape_cast %50 : vector<2x128xf32> to vector<1x2x128xf32>
      %cst_37 = arith.constant dense<0.000000e+00> : vector<1xf32>
      %52 = vector.multi_reduction <add>, %51, %cst_37 [1, 2] : vector<1x2x128xf32> to vector<1xf32>
      %53 = vector.shape_cast %52 : vector<1xf32> to vector<1x1x1xf32>
      %54 = vector.extract %53[0, 0, 0] : f32 from vector<1x1x1xf32>
      %c0_38 = arith.constant 0 : index
      %c0_39 = arith.constant 0 : index
      %55 = vector.load %arg7[%c0_38, %c0_39] : memref<2x128xf32, #tpu.memory_space<vmem>>, vector<2x128xf32>
      %56 = vector.shape_cast %55 : vector<2x128xf32> to vector<1x2x128xf32>
      %cst_40 = arith.constant dense<0.000000e+00> : vector<1xf32>
      %57 = vector.multi_reduction <add>, %56, %cst_40 [1, 2] : vector<1x2x128xf32> to vector<1xf32>
      %58 = vector.shape_cast %57 : vector<1xf32> to vector<1x1x1xf32>
      %59 = vector.extract %58[0, 0, 0] : f32 from vector<1x1x1xf32>
      %60 = arith.addf %54, %59 : f32
      %cst_41 = arith.constant 2.000000e+00 : f32
      %61 = arith.mulf %cst_41, %49 : f32
      %cst_42 = arith.constant 1.000000e+00 : f32
      %62 = arith.addf %61, %cst_42 : f32
      %cst_43 = arith.constant 1.000000e+00 : f32
      %63 = arith.addf %60, %cst_43 : f32
      %64 = arith.divf %62, %63 : f32
      %cst_44 = arith.constant 1.000000e+00 : f32
      %65 = arith.subf %cst_44, %64 : f32
      %c0_45 = arith.constant 0 : index
      %66 = memref.load %arg4[%c0_45] : memref<1xf32, #tpu.memory_space<smem>>
      memref.store %65, %arg4[%c0_45] : memref<1xf32, #tpu.memory_space<smem>>
    } else {
    }
    return
  }
  func.func @transform_0(%arg0: i32, %arg1: i32) -> (i32, i32, i32, i32) {
    %c0_i32 = arith.constant 0 : i32
    %c0_i32_0 = arith.constant 0 : i32
    %c0_i32_1 = arith.constant 0 : i32
    return %arg0, %c0_i32, %arg1, %c0_i32_0 : i32, i32, i32, i32
  }
  func.func @transform_1(%arg0: i32, %arg1: i32) -> (i32, i32, i32) {
    %c0_i32 = arith.constant 0 : i32
    %c0_i32_0 = arith.constant 0 : i32
    return %arg0, %arg1, %c0_i32 : i32, i32, i32
  }
  func.func @transform_2(%arg0: i32, %arg1: i32) -> i32 {
    %c0_i32 = arith.constant 0 : i32
    %c0_i32_0 = arith.constant 0 : i32
    return %c0_i32 : i32
  }
}

</mosaic_0001>

<llo_original>
// kernel: tpu_custom_call.1
$region0: #{tpu_custom_call.1}
  #allocation0 [shape = 'u32[]', space=smem, size = 0x4, offset = 0x4, fixed_abs, tag = 'smem constant byte address 0x4 - core index']
  #allocation1 [shape = 'u32[144,128]{1,0:T(1,128)}', space=vmem, size = 0x12000, scoped, tag = 'internal scratch']
  #allocation2 [shape = 'f32[2,128]{1,0:T(2,128)}', space=vmem, size = 0x400, scoped, tag = 'scratch operand']
  #allocation3 [shape = 'f32[2,128]{1,0:T(2,128)}', space=vmem, size = 0x400, scoped, tag = 'scratch operand']
  #allocation4 [shape = 'f32[2,128]{1,0:T(2,128)}', space=vmem, size = 0x400, scoped, tag = 'scratch operand']
  %s0 = inlined_call_operand.hbm [shape: f32[2,4,2,128], index: 0, kind: input, shape index: {}]
  %s1 = inlined_call_operand.hbm [shape: s32[2,2,128], index: 1, kind: input, shape index: {}]
  %s2 = inlined_call_operand.hbm [shape: f32[1], index: 2, kind: output, shape index: {}]
  %s3 = sld [smem:[#allocation0]]
  $region57: #{tpu_custom_call.1} parent=0
    _
  %s5 = ssub.s32 1, %s3
  %s6 = scalar_select 0, %s5, %s3
  $region1: #{tpu_custom_call.1} parent=0
    #allocation5 [shape = 'u8[8192]{0}', space=vmem, size = 0x2000, scoped, tag = 'input window, operand 0']
    #allocation6 [shape = 's32[2]{0}', space=sflag, size = 0x8, scoped, tag = 'scoped memory for tpu_custom_call.1']
    #allocation7 [shape = 's32[2]{0}', space=sflag, size = 0x8, scoped, tag = 'scoped memory for tpu_custom_call.1']
    #allocation8 [shape = 'u8[2048]{0}', space=vmem, size = 0x800, scoped, tag = 'input window, operand 1']
    #allocation9 [shape = 's32[2]{0}', space=sflag, size = 0x8, scoped, tag = 'scoped memory for tpu_custom_call.1']
    #allocation10 [shape = 'u8[512]{0}', space=smem, size = 0x200, scoped, tag = 'output window, operand 0, single buffered']
    %7 = vsyncpa [#allocation6], 0
    %s8 = scalar_lea.sflag [#allocation6], 1
    %9 = vsyncpa %s8, 0
    %10 = vsyncpa [#allocation9], 0
    %s11 = scalar_lea.sflag [#allocation9], 1
    %12 = vsyncpa %s11, 0
    %13 = vsyncpa [#allocation7], 0
    loop: start=0, step=1, limit=4
    $region2: #{tpu_custom_call.1} parent=1 // loop_pre_header
      _
    $region3: #{tpu_custom_call.1} parent=1 // loop_header
      %s15 = sphi 0, %s19
      %p16 = scmp.ge.s32.totalorder %s15, 4
      %s22 = sphi 0, %s34
      %s23 = sphi 0, %s30
      %s24 = sphi 0, %s22
      %s25 = sphi 0, %s23
      %s26 = sphi 0, %s24
      %s27 = sphi 0, %s25
      %s39 = sphi 0, %s41
      %s42 = sphi 0, %s39
      %s43 = sphi 0, %s42
      %s59 = sphi 0, %s43
      %s67 = sphi 0, %s69
      %s70 = sphi 0, %s67
      %s71 = sphi 0, %s70
      %s87 = sphi 0, %s71
      %s91 = sphi 0, %s91
      %s93 = sphi 0, %s91
      %s94 = sphi 0, %s93
      %s108 = sphi 0, %s94
    $region4: #{tpu_custom_call.1} parent=1 // loop_header_branch
      %18 = sbr.rel (%p16) target = $region8
    $region5: #{tpu_custom_call.1} parent=1 // loop_body
      %s20 = ssub.s32 %s15, 1
      %s21 = ssub.s32 %s15, 2
      %s28 = sadd.s32 1, %s23
      %p29 = scmp.ge.s32.totalorder %s28, 1
      %s30 = scalar_select %p29, 0, %s28
      %s31 = sadd.s32 1, %s22
      %s32 = scalar_select %p29, %s31, %s22
      %p33 = scmp.ge.s32.totalorder %s32, 2
      %s34 = scalar_select %p33, 0, %s32
      %s35 = ssub.s32 %s22, %s34
      %s36 = ssub.s32 %s23, %s30
      %s37 = sor.u32 %s35, %s36
      %p38 = scmp.eq.s32.totalorder %s37, 0
      %s40 = sadd.s32 %s39, 1
      %s41 = scalar_select %p38, %s39, %s40
      %p44 = pneg %p38
      %p45 = scmp.eq.s32.totalorder %s15, 1
      %p46 = por %p44, %p45
      %p47 = scmp.ne.s32.totalorder %s39, %s42
      %p48 = scmp.eq.s32.totalorder %s15, 0
      %p49 = por %p47, %p48
      %p50 = scmp.ne.s32.totalorder %s39, %s42
      %p51 = scmp.eq.s32.totalorder %s20, 1
      %p52 = por %p50, %p51
      %p53 = scmp.ne.s32.totalorder %s42, %s43
      %p54 = scmp.eq.s32.totalorder %s20, 0
      %p55 = por %p53, %p54
      %p56 = scmp.ne.s32.totalorder %s42, %s43
      %p57 = scmp.eq.s32.totalorder %s21, 1
      %p58 = por %p56, %p57
      %p60 = scmp.ne.s32.totalorder %s43, %s59
      %p61 = scmp.eq.s32.totalorder %s21, 0
      %p62 = por %p60, %p61
      %s63 = ssub.s32 %s22, %s34
      %s64 = ssub.s32 %s23, %s30
      %s65 = sor.u32 %s63, %s64
      %p66 = scmp.eq.s32.totalorder %s65, 0
      %s68 = sadd.s32 %s67, 1
      %s69 = scalar_select %p66, %s67, %s68
      %p72 = pneg %p66
      %p73 = scmp.eq.s32.totalorder %s15, 1
      %p74 = por %p72, %p73
      %p75 = scmp.ne.s32.totalorder %s67, %s70
      %p76 = scmp.eq.s32.totalorder %s15, 0
      %p77 = por %p75, %p76
      %p78 = scmp.ne.s32.totalorder %s67, %s70
      %p79 = scmp.eq.s32.totalorder %s20, 1
      %p80 = por %p78, %p79
      %p81 = scmp.ne.s32.totalorder %s70, %s71
      %p82 = scmp.eq.s32.totalorder %s20, 0
      %p83 = por %p81, %p82
      %p84 = scmp.ne.s32.totalorder %s70, %s71
      %p85 = scmp.eq.s32.totalorder %s21, 1
      %p86 = por %p84, %p85
      %p88 = scmp.ne.s32.totalorder %s71, %s87
      %p89 = scmp.eq.s32.totalorder %s21, 0
      %p90 = por %p88, %p89
      %s92 = sadd.s32 %s91, 1
      %p95 = scmp.eq.s32.totalorder %s15, 1
      %p96 = scmp.ne.s32.totalorder %s91, %s93
      %p97 = scmp.eq.s32.totalorder %s15, 0
      %p98 = por %p96, %p97
      %p99 = scmp.ne.s32.totalorder %s91, %s93
      %p100 = scmp.eq.s32.totalorder %s20, 1
      %p101 = por %p99, %p100
      %p102 = scmp.ne.s32.totalorder %s93, %s94
      %p103 = scmp.eq.s32.totalorder %s20, 0
      %p104 = por %p102, %p103
      %p105 = scmp.ne.s32.totalorder %s93, %s94
      %p106 = scmp.eq.s32.totalorder %s21, 1
      %p107 = por %p105, %p106
      %p109 = scmp.ne.s32.totalorder %s94, %s108
      %p110 = scmp.eq.s32.totalorder %s21, 0
      %p111 = por %p109, %p110
      %p112 = scmp.le.s32.totalorder 1, %s15
      %p113 = scmp.lt.s32.totalorder %s15, 3
      %p114 = pnand %p112, %p113
      %p115 = pneg %p114
      // Predicated region
      $region9: #{tpu_custom_call.1} parent=5 // pred_check
        _
      $region10: #{tpu_custom_call.1} parent=5 // pred_check_branch
        %117 = sbr.rel (%p114) target = $region12
      $region11: #{tpu_custom_call.1} parent=5 // pred_region
        %s118 = ssub.s32 %s15, 1
      $region12: #{tpu_custom_call.1} parent=5 // pred_fallthru
        _
      %p119 = scmp.lt.s32.totalorder %s15, 2
      // Predicated region
      $region13: #{tpu_custom_call.1} parent=5 // pred_check
        %p120 = pneg %p119
      $region14: #{tpu_custom_call.1} parent=5 // pred_check_branch
        %122 = sbr.rel (%p120) target = $region16
      $region15: #{tpu_custom_call.1} parent=5 // pred_region
        // Predicated region
        $region17: #{tpu_custom_call.1} parent=15 // pred_check
          %p123 = pneg %p49
        $region18: #{tpu_custom_call.1} parent=15 // pred_check_branch
          %125 = sbr.rel (%p123) target = $region20
        $region19: #{tpu_custom_call.1} parent=15 // pred_region
          %s126 = sand.u32 %s39, 1
          %s127 = scalar_lea.sflag [#allocation6], %s126
          %s128 = sand.u32 %s39, 1
          %s129 = smul.addr %s128, 8
          %s130 = scalar_lea.vmem [#allocation5], %s129
          %s132 = ssub.s32 128, 128
          %133 = vsyncadd %s127, %s132
          %s134 = smul.addr %s22, 4
          %s135 = sadd.s32 %s23, %s134
          %s136 = smul.addr %s135, 32
          %s137 = scalar_lea.hbm %s0, %s136
          %s138 = sshll.u32 %s130, 4
          %s139 = int_to_ptr.vmem [resolvable:$true] %s138
          %144 = dma.hbm_to_vmem [thread:$0]  %s137, 128, %s139, %s127, 32, 32, 2
        $region20: #{tpu_custom_call.1} parent=15 // pred_fallthru
          _
        // Predicated region
        $region21: #{tpu_custom_call.1} parent=15 // pred_check
          %p145 = pneg %p77
        $region22: #{tpu_custom_call.1} parent=15 // pred_check_branch
          %147 = sbr.rel (%p145) target = $region24
        $region23: #{tpu_custom_call.1} parent=15 // pred_region
          %s148 = sand.u32 %s67, 1
          %s149 = scalar_lea.sflag [#allocation9], %s148
          %s150 = sand.u32 %s67, 1
          %s151 = smul.addr %s150, 2
          %s152 = scalar_lea.vmem [#allocation8], %s151
          %s154 = ssub.s32 32, 32
          %155 = vsyncadd %s149, %s154
          %s156 = sadd.s32 %s23, %s22
          %s157 = smul.addr %s156, 32
          %s158 = scalar_lea.hbm %s1, %s157
          %s160 = sshll.u32 %s152, 4
          %s161 = int_to_ptr.vmem [resolvable:$true] %s160
          %163 = dma.hbm_to_vmem [thread:$0]  %s158, 32, %s161, %s149
        $region24: #{tpu_custom_call.1} parent=15 // pred_fallthru
          _
      $region16: #{tpu_custom_call.1} parent=5 // pred_fallthru
        _
      %p164 = scmp.le.s32.totalorder 1, %s15
      %p165 = scmp.lt.s32.totalorder %s15, 3
      %p166 = pnand %p164, %p165
      %p167 = pneg %p166
      // Predicated region
      $region25: #{tpu_custom_call.1} parent=5 // pred_check
        _
      $region26: #{tpu_custom_call.1} parent=5 // pred_check_branch
        %169 = sbr.rel (%p166) target = $region28
      $region27: #{tpu_custom_call.1} parent=5 // pred_region
        %s170 = ssub.s32 %s15, 1
        %s171 = sand.u32 %s42, 1
        %s172 = scalar_lea.sflag [#allocation6], %s171
        %s173 = sand.u32 %s42, 1
        %s174 = smul.addr %s173, 8
        %s175 = scalar_lea.vmem [#allocation5], %s174
        // Predicated region
        $region29: #{tpu_custom_call.1} parent=27 // pred_check
          %p176 = pneg %p55
        $region30: #{tpu_custom_call.1} parent=27 // pred_check_branch
          %178 = sbr.rel (%p176) target = $region32
        $region31: #{tpu_custom_call.1} parent=27 // pred_region
          %179 = dma.done %s172, 128
        $region32: #{tpu_custom_call.1} parent=27 // pred_fallthru
          _
        %s180 = sand.u32 %s70, 1
        %s181 = scalar_lea.sflag [#allocation9], %s180
        %s182 = sand.u32 %s70, 1
        %s183 = smul.addr %s182, 2
        %s184 = scalar_lea.vmem [#allocation8], %s183
        // Predicated region
        $region33: #{tpu_custom_call.1} parent=27 // pred_check
          %p185 = pneg %p83
        $region34: #{tpu_custom_call.1} parent=27 // pred_check_branch
          %187 = sbr.rel (%p185) target = $region36
        $region35: #{tpu_custom_call.1} parent=27 // pred_region
          %188 = dma.done %s181, 32
        $region36: #{tpu_custom_call.1} parent=27 // pred_fallthru
          _
        %s189 = sand.u32 %s42, 1
        %s190 = scalar_lea.sflag [#allocation6], %s189
        %s191 = sand.u32 %s42, 1
        %s192 = smul.addr %s191, 8
        %s193 = scalar_lea.vmem [#allocation5], %s192
        %p194 = pneg %p55
        %p195 = pneg %p52
        %s196 = sand.u32 %s70, 1
        %s197 = scalar_lea.sflag [#allocation9], %s196
        %s198 = sand.u32 %s70, 1
        %s199 = smul.addr %s198, 2
        %s200 = scalar_lea.vmem [#allocation8], %s199
        %p201 = pneg %p83
        %p202 = pneg %p80
        %p203 = pneg %p104
        %p204 = pneg %p101
        %p205 = scmp.eq.s32.totalorder %s24, 0
        %p206 = scmp.eq.s32.totalorder %s25, 0
        %p207 = pnand %p205, %p206
        %p208 = pneg %p207
        // Predicated region
        $region37: #{tpu_custom_call.1} parent=27 // pred_check
          _
        $region38: #{tpu_custom_call.1} parent=27 // pred_check_branch
          %210 = sbr.rel (%p207) target = $region40
        $region39: #{tpu_custom_call.1} parent=27 // pred_region
          %211 = vst [vmem:[#allocation2] sm:$0x3] 0.0
          %212 = vst [vmem:[#allocation3] sm:$0x3] 0.0
          %213 = vst [vmem:[#allocation4] sm:$0x3] 0.0
        $region40: #{tpu_custom_call.1} parent=27 // pred_fallthru
          _
        %s214 = scalar_lea.vmem %s175, 2 [#allocation5]
        %v215 = vld [vmem:[%s214] sm:$0x3]
        %v216 = vld [vmem:[%s175] sm:$0x3]
        %v217 = vsub.f32 %v216, %v215
        %v218 = vmul.f32 %v217, 1.442695
        %v219 = vpow.pop %v218
        %v220 = vadd.f32 %v219, 1.0
        %s221 = scalar_lea.vmem %s175, 4 [#allocation5]
        %v222 = vld [vmem:[%s221] sm:$0x3]
        %v223 = vsub.f32 %v222, %v215
        %v224 = vmul.f32 %v223, 1.442695
        %v225 = vpow.pop %v224
        %v226 = vadd.f32 %v220, %v225
        %s227 = scalar_lea.vmem %s175, 6 [#allocation5]
        %v228 = vld [vmem:[%s227] sm:$0x3]
        %v229 = vsub.f32 %v228, %v215
        %v230 = vmul.f32 %v229, 1.442695
        %v231 = vpow.pop %v230
        %v232 = vadd.f32 %v226, %v231
        %v233 = vrcp.pop %v232
        %v234 = vld [vmem:[%s184] sm:$0x3]
        %vm235 = vcmp.eq.s32.totalorder %v234, 1
        %v236 = vsel %vm235, 1, 0
        %v237 = vcvt.s32.f32 %v236
        %v238 = vld [vmem:[#allocation2] sm:$0x3]
        %v239 = vmul.f32 %v233, %v237
        %v240 = vadd.f32 %v238, %v239
        %241 = vst [vmem:[#allocation2] sm:$0x3] %v240
        %v242 = vld [vmem:[#allocation3] sm:$0x3]
        %v243 = vadd.f32 %v242, %v233
        %244 = vst [vmem:[#allocation3] sm:$0x3] %v243
        %v245 = vld [vmem:[#allocation4] sm:$0x3]
        %v246 = vadd.f32 %v245, %v237
        %247 = vst [vmem:[#allocation4] sm:$0x3] %v246
        %p248 = scmp.eq.s32.totalorder %s24, 1
        %p249 = pnand %p248, %p206
        %p250 = pneg %p249
        // Predicated region
        $region41: #{tpu_custom_call.1} parent=27 // pred_check
          _
        $region42: #{tpu_custom_call.1} parent=27 // pred_check_branch
          %252 = sbr.rel (%p249) target = $region44
        $region43: #{tpu_custom_call.1} parent=27 // pred_region
          %v253 = vld [vmem:[#allocation2] sm:$0x3]
          %vm254 = vcmask 1041408
          %v255 = vsel %vm254, %v253, 0.0
          %256 = vadd.xlane.f32.xlu0 %v255
          %v257 = vpop.xlane.xlu0 %256
          %v258 = vrot.slane %v257, 4
          %v259 = vadd.f32 %v257, %v258
          %v260 = vrot.slane %v259, 2
          %v261 = vadd.f32 %v259, %v260
          %v262 = vrot.slane %v261, 1
          %v263 = vadd.f32 %v261, %v262
          %s264 = vtos %v263
          %v265 = vld [vmem:[#allocation3] sm:$0x3]
          %v266 = vsel %vm254, %v265, 0.0
          %267 = vadd.xlane.f32.xlu0 %v266
          %v268 = vpop.xlane.xlu0 %267
          %v269 = vrot.slane %v268, 4
          %v270 = vadd.f32 %v268, %v269
          %v271 = vrot.slane %v270, 2
          %v272 = vadd.f32 %v270, %v271
          %v273 = vrot.slane %v272, 1
          %v274 = vadd.f32 %v272, %v273
          %s275 = vtos %v274
          %v276 = vld [vmem:[#allocation4] sm:$0x3]
          %v277 = vsel %vm254, %v276, 0.0
          %278 = vadd.xlane.f32.xlu0 %v277
          %v279 = vpop.xlane.xlu0 %278
          %v280 = vrot.slane %v279, 4
          %v281 = vadd.f32 %v279, %v280
          %v282 = vrot.slane %v281, 2
          %v283 = vadd.f32 %v281, %v282
          %v284 = vrot.slane %v283, 1
          %v285 = vadd.f32 %v283, %v284
          %s286 = vtos %v285
          %s287 = sadd.f32 %s275, %s286
          %s288 = smul.f32 %s264, 2.0
          %s289 = sadd.f32 %s288, 1.0
          %s290 = sadd.f32 %s287, 1.0
          %v291 = vstv %s290
          %v292 = vrcp.pop %v291
          %s293 = vtos %v292
          %s294 = smul.f32 %s289, %s293
          %s295 = ssub.f32 1.0, %s294
          %s296 = scalar_lea.smem [#allocation10], 0
          %297 = sst [smem:[%s296]] %s295
        $region44: #{tpu_custom_call.1} parent=27 // pred_fallthru
          _
        // Predicated region
        $region45: #{tpu_custom_call.1} parent=27 // pred_check
          %p298 = pneg %p101
        $region46: #{tpu_custom_call.1} parent=27 // pred_check_branch
          %300 = sbr.rel (%p298) target = $region48
        $region47: #{tpu_custom_call.1} parent=27 // pred_region
          %s302 = ssub.s32 16, 16
          %303 = vsyncadd [#allocation7], %s302
          %306 = dma.smem_to_hbm [#allocation10], 16, %s2, [#allocation7]
        $region48: #{tpu_custom_call.1} parent=27 // pred_fallthru
          _
        // Predicated region
        $region49: #{tpu_custom_call.1} parent=27 // pred_check
          %p307 = pneg %p101
        $region50: #{tpu_custom_call.1} parent=27 // pred_check_branch
          %309 = sbr.rel (%p307) target = $region52
        $region51: #{tpu_custom_call.1} parent=27 // pred_region
          %310 = dma.done [#allocation7], 16
        $region52: #{tpu_custom_call.1} parent=27 // pred_fallthru
          _
        %311 = sfence
      $region28: #{tpu_custom_call.1} parent=5 // pred_fallthru
        _
      %p312 = scmp.le.s32.totalorder 2, %s15
      // Predicated region
      $region53: #{tpu_custom_call.1} parent=5 // pred_check
        %p313 = pneg %p312
      $region54: #{tpu_custom_call.1} parent=5 // pred_check_branch
        %315 = sbr.rel (%p313) target = $region56
      $region55: #{tpu_custom_call.1} parent=5 // pred_region
        %s316 = ssub.s32 %s15, 2
      $region56: #{tpu_custom_call.1} parent=5 // pred_fallthru
        _
    $region6: #{tpu_custom_call.1} parent=1 // loop_footer
      %s19 = sadd.s32 1, %s15
    $region7: #{tpu_custom_call.1} parent=1 // loop_footer_branch
      %14 = sbr.rel target = $region3
    $region8: #{tpu_custom_call.1} parent=1 // loop_exit
      _
    %317 = vsyncpa [#allocation6], 1
    %s318 = scalar_lea.sflag [#allocation6], 1
    %319 = vsyncpa %s318, 1
    %320 = vsyncpa [#allocation9], 1
    %s321 = scalar_lea.sflag [#allocation9], 1
    %322 = vsyncpa %s321, 1
    %323 = vsyncpa [#allocation7], 1
    %s324 = scalar_lea.sflag [#allocation7], 1
    %325 = vsyncpa %s324, 1

</llo_original>
